<compile_context>
chip_gen: v5e
topology: v5e:2x2
jax: 0.10.0
libtpu: 0.0.40
codegen_flags: <defaults>
</compile_context>

<pallas_src>
import functools

import numpy as np

import jax
import jax.numpy as jnp
from jax.experimental import pallas as pl
from jax.experimental.pallas import tpu as pltpu

LANE = 128                               # pad channel dims to 128 (lane-dense stores / MXU width)
_VMEM_LIMIT = 48 * 1024 * 1024           # scoped-VMEM cap handed to Mosaic
_RESIDENT_BUDGET = 40 * 1024 * 1024      # footprint threshold for VMEM-resident H_all (v7x headroom)


def _round_up(x, m):
    return ((x + m - 1) // m) * m


def _pad2(x, shape):
    return jnp.pad(x, [(0, s - d) for d, s in zip(x.shape, shape)])


def _choose_tiles(n):
    """Pick (n_padded, row_tile, k_tile) for the propagate/dense grids.

    Large tiles amortize per-grid-step overhead; for n > 256 we keep >= 2 row
    tiles so the "parallel" axis can shard across v7x's two TensorCores.
    """
    if n > 1024:
        tm = 512
    elif n > 256:
        tm = 256
    else:
        tm = 128
    n_p = _round_up(n, tm)
    tk = 256 if n_p % 256 == 0 else 128
    return n_p, tm, tk


# ---------------------------------------------------------------------------
# Fused feature transform: out = maybe_relu(x @ w + b), bf16 MXU operands, f32 accumulate.
# Used for the per-layer wide pass H_all = X @ [W_root | W_1 | ... | W_R] (+ folded bias).
# ---------------------------------------------------------------------------
def _dense_kernel(x_ref, w_ref, b_ref, o_ref, *, relu):
    y = jnp.dot(x_ref[...], w_ref[...], preferred_element_type=jnp.float32) + b_ref[...]
    if relu:
        y = jnp.maximum(y, 0.0)
    o_ref[...] = y.astype(o_ref.dtype)


def dense(x_bf16, w_bf16, b_f32, *, relu, out_dtype, tm):
    n, kdim = x_bf16.shape
    mdim = w_bf16.shape[1]
    grid = (n // tm,)
    flops = 2 * n * kdim * mdim
    bytes_acc = (x_bf16.size * 2
                 + w_bf16.size * 2                     # weight resident (constant index_map)
                 + n * mdim * np.dtype(out_dtype).itemsize)
    return pl.pallas_call(
        functools.partial(_dense_kernel, relu=relu),
        out_shape=jax.ShapeDtypeStruct((n, mdim), out_dtype),
        grid=grid,
        in_specs=[
            pl.BlockSpec((tm, kdim), lambda i: (i, 0)),
            pl.BlockSpec((kdim, mdim), lambda i: (0, 0)),
            pl.BlockSpec((1, mdim), lambda i: (0, 0)),
        ],
        out_specs=pl.BlockSpec((tm, mdim), lambda i: (i, 0)),
        compiler_params=pltpu.CompilerParams(
            dimension_semantics=("parallel",),
            vmem_limit_bytes=_VMEM_LIMIT,
        ),
        cost_estimate=pl.CostEstimate(flops=int(flops), transcendentals=0,
                                      bytes_accessed=int(bytes_acc)),
    )(x_bf16, w_bf16, b_f32)


# ---------------------------------------------------------------------------
# Propagation kernels: for each node-row tile i (parallel across cores),
#   acc  = H_root[i]   (bias already folded into H_root)          (r == 0, k == 0)
#   acc += A_r[i, k] @ H_r[k]          over (r, k) reduction       (sequential)
#   out[i] = relu(acc) (or acc on the last layer)                  (last r, last k)
# Two variants: H_all fully VMEM-resident (preferred) or streamed per block.
# ---------------------------------------------------------------------------
def _propagate_resident_kernel(a_ref, hall_ref, o_ref, acc_ref, *,
                               tm, tk, cout_p, apply_relu):
    i = pl.program_id(0)
    r = pl.program_id(1)
    k = pl.program_id(2)

    @pl.when(jnp.logical_and(r == 0, k == 0))
    def _():
        row0 = pl.multiple_of(i * tm, tm)
        acc_ref[...] = hall_ref[pl.ds(row0, tm), pl.ds(0, cout_p)].astype(jnp.float32)

    rowk = pl.multiple_of(k * tk, tk)
    col = pl.multiple_of((r + 1) * cout_p, cout_p)
    acc_ref[...] += jnp.dot(a_ref[...],
                            hall_ref[pl.ds(rowk, tk), pl.ds(col, cout_p)],
                            preferred_element_type=jnp.float32)

    @pl.when(jnp.logical_and(r == pl.num_programs(1) - 1,
                             k == pl.num_programs(2) - 1))
    def _():
        out = acc_ref[...]
        if apply_relu:
            out = jnp.maximum(out, 0.0)
        o_ref[...] = out.astype(o_ref.dtype)


def _propagate_stream_kernel(a_ref, hrel_ref, hroot_ref, o_ref, acc_ref, *, apply_relu):
    r = pl.program_id(1)
    k = pl.program_id(2)

    @pl.when(jnp.logical_and(r == 0, k == 0))
    def _():
        acc_ref[...] = hroot_ref[...].astype(jnp.float32)

    acc_ref[...] += jnp.dot(a_ref[...], hrel_ref[...],
                            preferred_element_type=jnp.float32)

    @pl.when(jnp.logical_and(r == pl.num_programs(1) - 1,
                             k == pl.num_programs(2) - 1))
    def _():
        out = acc_ref[...]
        if apply_relu:
            out = jnp.maximum(out, 0.0)
        o_ref[...] = out.astype(o_ref.dtype)


def _propagate_vmem_bytes(n_p, tm, tk, cout_p, num_rel, out_itemsize, resident):
    adj = 2 * tm * tk * 2                               # double-buffered bf16 A tile
    out = 2 * tm * cout_p * out_itemsize                # double-buffered output tile
    acc = tm * cout_p * 4                               # f32 accumulator scratch
    if resident:
        hall = 2 * n_p * (num_rel + 1) * cout_p * 2     # conservative: assume double-buffered
    else:
        hall = 2 * (tk + tm) * cout_p * 2               # H_rel + H_root blocks, double-buffered
    return adj + out + acc + hall


def rgcn_propagate(adj_bf16, h_all_bf16, *, cout_p, num_rel, apply_relu,
                   out_dtype, tm, tk):
    n_p = adj_bf16.shape[1]
    hall_cols = (num_rel + 1) * cout_p
    grid = (n_p // tm, num_rel, n_p // tk)
    out_itemsize = np.dtype(out_dtype).itemsize
    resident = (_propagate_vmem_bytes(n_p, tm, tk, cout_p, num_rel,
                                      out_itemsize, True) <= _RESIDENT_BUDGET)

    flops = 2 * num_rel * n_p * n_p * cout_p
    if resident:
        bytes_acc = (adj_bf16.size * 2 + h_all_bf16.size * 2
                     + n_p * cout_p * out_itemsize)
        kern = functools.partial(_propagate_resident_kernel, tm=tm, tk=tk,
                                 cout_p=cout_p, apply_relu=apply_relu)
        in_specs = [
            # per-relation adjacency tile; leading relation dim squeezed away in-kernel
            pl.BlockSpec((pl.Squeezed(), tm, tk), lambda i, r, k: (r, i, k)),
            # fused H_all kept fully VMEM-resident (constant index_map)
            pl.BlockSpec((n_p, hall_cols), lambda i, r, k: (0, 0)),
        ]
        args = (adj_bf16, h_all_bf16)
    else:
        bytes_acc = (adj_bf16.size * 2
                     + (n_p // tm) * num_rel * n_p * cout_p * 2   # H_rel re-read per row tile
                     + n_p * cout_p * (2 + out_itemsize))         # H_root read + output
        kern = functools.partial(_propagate_stream_kernel, apply_relu=apply_relu)
        in_specs = [
            pl.BlockSpec((pl.Squeezed(), tm, tk), lambda i, r, k: (r, i, k)),
            # relation-r slice of fused H_all: column block r+1
            pl.BlockSpec((tk, cout_p), lambda i, r, k: (k, r + 1)),
            # root slice of fused H_all: column block 0, this row tile
            pl.BlockSpec((tm, cout_p), lambda i, r, k: (i, 0)),
        ]
        args = (adj_bf16, h_all_bf16, h_all_bf16)

    return pl.pallas_call(
        kern,
        out_shape=jax.ShapeDtypeStruct((n_p, cout_p), out_dtype),
        grid=grid,
        in_specs=in_specs,
        out_specs=pl.BlockSpec((tm, cout_p), lambda i, r, k: (i, 0)),
        scratch_shapes=[pltpu.VMEM((tm, cout_p), jnp.float32)],
        compiler_params=pltpu.CompilerParams(
            dimension_semantics=("parallel", "arbitrary", "arbitrary"),
            vmem_limit_bytes=_VMEM_LIMIT,
        ),
        cost_estimate=pl.CostEstimate(flops=int(flops), transcendentals=0,
                                      bytes_accessed=int(bytes_acc)),
    )(*args)


# ---------------------------------------------------------------------------
# Glue: dense normalized adjacency (scatter-mean as matmul), params, forward.
# ---------------------------------------------------------------------------
def build_norm_adj(edge_index, edge_type, num_nodes_padded, num_relations):
    # TODO(synk): build block-CSR directly in the compressed dtype for real (sparse, large) graphs
    # instead of materializing a dense (R, N_p, N_p) f32 intermediate via scatter-add.
    src, dst = edge_index[0], edge_index[1]
    a = jnp.zeros((num_relations, num_nodes_padded, num_nodes_padded), jnp.float32)
    a = a.at[edge_type, dst, src].add(1.0)          # multiplicity of (j -> i) under relation r
    deg = a.sum(axis=-1, keepdims=True)             # incoming edges of relation r at node i
    return (a / jnp.maximum(deg, 1.0)).astype(jnp.bfloat16)   # mean aggregation, bf16 stream


def init_params(key, n_in_dict, n_hid, n_out, num_relations, num_bases, hop):
    params = {"fc1": {}, "layers": []}
    for nt, din in n_in_dict.items():
        key, k1, k2 = jax.random.split(key, 3)
        params["fc1"][nt] = {
            "w": 0.1 * jax.random.normal(k1, (din, n_hid), jnp.float32),
            "b": 0.1 * jax.random.normal(k2, (n_hid,), jnp.float32),
        }
    for i in range(hop):
        cout = n_hid if i < hop - 1 else n_out
        key, k1, k2, k3, k4 = jax.random.split(key, 5)
        params["layers"].append({
            "basis": 0.1 * jax.random.normal(k1, (num_bases, n_hid, cout), jnp.float32),
            "comp": 0.1 * jax.random.normal(k2, (num_relations, num_bases), jnp.float32),
            "root": 0.1 * jax.random.normal(k3, (n_hid, cout), jnp.float32),
            "bias": 0.1 * jax.random.normal(k4, (cout,), jnp.float32),
        })
    return params


def rgcn_forward(params, x_dict, node_type_order, edge_index, edge_type,
                 num_relations, hop):
    n_hid = params["layers"][0]["root"].shape[0]
    hid_p = _round_up(n_hid, LANE)

    # --- fc1 per node type: linear + relu (dropout = identity in eval mode) ---
    # Left to XLA per perf review: FLOPs are negligible and per-type pallas calls with
    # row tiles as small as 8 are pure launch/sub-tile overhead.
    xs = []
    for nt in node_type_order:
        p = params["fc1"][nt]
        xs.append(jnp.maximum(x_dict[nt] @ p["w"] + p["b"], 0.0))
    x = jnp.concatenate(xs, axis=0)                 # (N, n_hid) f32

    n = x.shape[0]
    n_p, tm, tk = _choose_tiles(n)
    # bf16 intermediate activations end-to-end (f32 accumulate inside the kernels)
    x = _pad2(x, (n_p, hid_p)).astype(jnp.bfloat16)

    adj = build_norm_adj(edge_index, edge_type, n_p, num_relations)   # (R, n_p, n_p) bf16

    n_out = params["layers"][-1]["root"].shape[1]
    num_layers = len(params["layers"])
    for i, layer in enumerate(params["layers"]):
        cin, cout = layer["root"].shape
        cin_p, cout_p = _round_up(cin, LANE), _round_up(cout, LANE)
        # basis decomposition (tiny param-setup matmul, plain XLA glue)
        w_rel = jnp.einsum("rb,bio->rio", layer["comp"], layer["basis"])   # (R, cin, cout)
        # fuse [root | W_1 | ... | W_R] into one lane-dense (cin_p, (R+1)*cout_p) bf16 weight
        w_all = jnp.concatenate([layer["root"][None], w_rel], axis=0)
        w_all = jnp.pad(w_all, ((0, 0), (0, cin_p - cin), (0, cout_p - cout)))
        w_all = jnp.transpose(w_all, (1, 0, 2)).reshape(
            cin_p, (num_relations + 1) * cout_p).astype(jnp.bfloat16)
        # fold the layer bias into the root column block of the fused pass
        b_all = jnp.zeros((1, (num_relations + 1) * cout_p), jnp.float32)
        b_all = b_all.at[0, :cout].set(layer["bias"])
        # one wide MXU pass: H_all = X @ [root | W_1 | ... | W_R] (+ bias in root block)
        h_all = dense(x, w_all, b_all, relu=False, out_dtype=jnp.bfloat16, tm=tm)

        last = (i == num_layers - 1)
        x = rgcn_propagate(adj, h_all, cout_p=cout_p, num_rel=num_relations,
                           apply_relu=not last,
                           out_dtype=(jnp.float32 if last else jnp.bfloat16),
                           tm=tm, tk=tk)

    return x[:n, :n_out]


if __name__ == "__main__":
    key = jax.random.PRNGKey(0)

    n_in_dict = {"author": 12, "paper": 20}
    node_counts = {"author": 8, "paper": 16}
    node_type_order = ["author", "paper"]
    n_hid, n_out = 32, 16
    num_relations, num_bases = 3, 2
    hop = 3
    num_nodes = sum(node_counts.values())   # 24
    num_edges = 40

    key, kp = jax.random.split(key)
    params = init_params(kp, n_in_dict, n_hid, n_out, num_relations, num_bases, hop)

    x_dict = {}
    for nt in node_type_order:
        key, kx = jax.random.split(key)
        x_dict[nt] = jax.random.normal(kx, (node_counts[nt], n_in_dict[nt]), jnp.float32)

    key, ke1, ke2, ket = jax.random.split(key, 4)
    edge_index = jnp.stack([
        jax.random.randint(ke1, (num_edges,), 0, num_nodes),
        jax.random.randint(ke2, (num_edges,), 0, num_nodes),
    ])
    edge_type = jax.random.randint(ket, (num_edges,), 0, num_relations)

    out = rgcn_forward(params, x_dict, node_type_order, edge_index, edge_type,
                       num_relations, hop)
    jax.block_until_ready(out)
    assert out.shape == (num_nodes, n_out)
    print("KERNEL_OK")
</pallas_src>

<mosaic_0001>
module attributes {stable_mosaic.version = 11 : i64} {
  func.func @_dense_kernel(%arg0: i32, %arg1: memref<128x128xbf16, #tpu.memory_space<vmem>>, %arg2: memref<128x512xbf16, #tpu.memory_space<vmem>>, %arg3: memref<1x512xf32, #tpu.memory_space<vmem>>, %arg4: memref<128x512xbf16, #tpu.memory_space<vmem>>) attributes {dimension_semantics = [#tpu.dimension_semantics<parallel>], iteration_bounds = array<i64: 1>, scalar_prefetch = 0 : i64, scratch_operands = 0 : i64, tpu.core_type = #tpu.core_type<tc>, window_params = [{transform_indices = @transform_0, window_bounds = array<i64: 128, 128>}, {pipeline_mode = #tpu.pipeline_mode<synchronous>, transform_indices = @transform_1, window_bounds = array<i64: 128, 512>}, {pipeline_mode = #tpu.pipeline_mode<synchronous>, transform_indices = @transform_2, window_bounds = array<i64: 1, 512>}, {transform_indices = @transform_3, window_bounds = array<i64: 128, 512>}]} {
    %c0 = arith.constant 0 : index
    %c0_0 = arith.constant 0 : index
    %0 = vector.load %arg1[%c0, %c0_0] : memref<128x128xbf16, #tpu.memory_space<vmem>>, vector<128x128xbf16>
    %c0_1 = arith.constant 0 : index
    %c0_2 = arith.constant 0 : index
    %1 = vector.load %arg2[%c0_1, %c0_2] : memref<128x512xbf16, #tpu.memory_space<vmem>>, vector<128x512xbf16>
    %cst = arith.constant dense<0.000000e+00> : vector<128x512xf32>
    %2 = tpu.matmul %0, %1, %cst {dimension_numbers = #tpu.dot_dimension_numbers<[1], [0], [0], [1], [0, 0, 1, 1], [], []>} : vector<128x128xbf16>, vector<128x512xbf16>, vector<128x512xf32> -> vector<128x512xf32>
    %c0_3 = arith.constant 0 : index
    %c0_4 = arith.constant 0 : index
    %3 = vector.load %arg3[%c0_3, %c0_4] : memref<1x512xf32, #tpu.memory_space<vmem>>, vector<1x512xf32>
    %4 = vector.broadcast %3 : vector<1x512xf32> to vector<128x512xf32>
    %5 = arith.addf %2, %4 : vector<128x512xf32>
    %6 = arith.truncf %5 : vector<128x512xf32> to vector<128x512xbf16>
    %c0_5 = arith.constant 0 : index
    %c0_6 = arith.constant 0 : index
    %7 = vector.load %arg4[%c0_5, %c0_6] : memref<128x512xbf16, #tpu.memory_space<vmem>>, vector<128x512xbf16>
    tpu.vector_store %arg4[%c0_5, %c0_6], %6 {strides = array<i32>} : memref<128x512xbf16, #tpu.memory_space<vmem>>, vector<128x512xbf16>,
    return
  }
  func.func @transform_0(%arg0: i32) -> (i32, i32) {
    %c0_i32 = arith.constant 0 : i32
    %c0_i32_0 = arith.constant 0 : i32
    return %arg0, %c0_i32 : i32, i32
  }
  func.func @transform_1(%arg0: i32) -> (i32, i32) {
    %c0_i32 = arith.constant 0 : i32
    %c0_i32_0 = arith.constant 0 : i32
    %c0_i32_1 = arith.constant 0 : i32
    return %c0_i32, %c0_i32_0 : i32, i32
  }
  func.func @transform_2(%arg0: i32) -> (i32, i32) {
    %c0_i32 = arith.constant 0 : i32
    %c0_i32_0 = arith.constant 0 : i32
    %c0_i32_1 = arith.constant 0 : i32
    return %c0_i32, %c0_i32_0 : i32, i32
  }
  func.func @transform_3(%arg0: i32) -> (i32, i32) {
    %c0_i32 = arith.constant 0 : i32
    %c0_i32_0 = arith.constant 0 : i32
    return %arg0, %c0_i32 : i32, i32
  }
}

</mosaic_0001>

<llo_original>
// kernel: tpu_custom_call.1
$region0: #{tpu_custom_call.1}
  #allocation0 [shape = 'u32[]', space=smem, size = 0x4, offset = 0x4, fixed_abs, tag = 'smem constant byte address 0x4 - core index']
  #allocation1 [shape = 'u32[72,128]{1,0:T(1,128)}', space=vmem, size = 0x9000, scoped, tag = 'internal scratch']
  %s0 = inlined_call_operand.hbm [shape: bf16[128,128], index: 0, kind: input, shape index: {}]
  %s1 = inlined_call_operand.hbm [shape: bf16[128,512], index: 1, kind: input, shape index: {}]
  %s2 = inlined_call_operand.hbm [shape: f32[1,512], index: 2, kind: input, shape index: {}]
  %s3 = inlined_call_operand.hbm [shape: bf16[128,512], index: 3, kind: output, shape index: {}]
  %s4 = sld [smem:[#allocation0]]
  $region34: #{tpu_custom_call.1} parent=0
    _
  %s6 = ssub.s32 1, %s4
  %s7 = scalar_select 0, %s6, %s4
  $region1: #{tpu_custom_call.1} parent=0
    #allocation2 [shape = 'u8[32768]{0}', space=vmem, size = 0x8000, scoped, tag = 'input window, operand 0, single buffered']
    #allocation3 [shape = 's32[1]{0}', space=sflag, size = 0x4, scoped, tag = 'scoped memory for tpu_custom_call.1']
    #allocation4 [shape = 's32[1]{0}', space=sflag, size = 0x4, scoped, tag = 'scoped memory for tpu_custom_call.1']
    #allocation5 [shape = 'u8[131072]{0}', space=vmem, size = 0x20000, scoped, tag = 'input window, operand 1, single buffered']
    #allocation6 [shape = 's32[1]{0}', space=sflag, size = 0x4, scoped, tag = 'scoped memory for tpu_custom_call.1']
    #allocation7 [shape = 'u8[2048]{0}', space=vmem, size = 0x800, scoped, tag = 'input window, operand 2, single buffered']
    #allocation8 [shape = 'u8[131072]{0}', space=vmem, size = 0x20000, scoped, tag = 'output window, operand 0, single buffered']
    %8 = vsyncpa [#allocation3], 0
    %9 = vsyncpa [#allocation6], 0
    %10 = vsyncpa [#allocation4], 0
    // Predicated region
    $region2: #{tpu_custom_call.1} parent=1 // pred_check
      _
    $region3: #{tpu_custom_call.1} parent=1 // pred_check_branch
      %12 = sbr.rel (0) target = $region5
    $region4: #{tpu_custom_call.1} parent=1 // pred_region
      %14 = vsyncadd [#allocation3], 0
      %s15 = sshll.u32 %s0, 4
      %s16 = int_to_ptr.hbm [resolvable:$true] %s15
      %s17 = sshll.u32 [#allocation2], 4
      %s18 = int_to_ptr.vmem [resolvable:$true] %s17
      %23 = dma.hbm_to_vmem [thread:$0]  %s16, 1024, %s18, [#allocation3], 64, 64, 4
    $region5: #{tpu_custom_call.1} parent=1 // pred_fallthru
      _
    // Predicated region
    $region6: #{tpu_custom_call.1} parent=1 // pred_check
      _
    $region7: #{tpu_custom_call.1} parent=1 // pred_check_branch
      %25 = sbr.rel (0) target = $region9
    $region8: #{tpu_custom_call.1} parent=1 // pred_region
      %27 = vsyncadd [#allocation6], 0
      %s28 = sshll.u32 %s1, 4
      %s29 = int_to_ptr.hbm [resolvable:$true] %s28
      %s30 = sshll.u32 [#allocation5], 4
      %s31 = int_to_ptr.vmem [resolvable:$true] %s30
      %36 = dma.hbm_to_vmem [thread:$0]  %s29, 4096, %s31, [#allocation6], 256, 256, 16
    $region9: #{tpu_custom_call.1} parent=1 // pred_fallthru
      _
    // Predicated region
    $region10: #{tpu_custom_call.1} parent=1 // pred_check
      _
    $region11: #{tpu_custom_call.1} parent=1 // pred_check_branch
      %38 = sbr.rel (0) target = $region13
    $region12: #{tpu_custom_call.1} parent=1 // pred_region
      %40 = vsyncadd [#allocation6], 0
      %s42 = sshll.u32 %s2, 4
      %s43 = int_to_ptr.hbm [resolvable:$true] %s42
      %s44 = sshll.u32 [#allocation7], 4
      %s45 = int_to_ptr.vmem [resolvable:$true] %s44
      %47 = dma.hbm_to_vmem [thread:$0]  %s43, 64, %s45, [#allocation6]
    $region13: #{tpu_custom_call.1} parent=1 // pred_fallthru
      _
    // Predicated region
    $region14: #{tpu_custom_call.1} parent=1 // pred_check
      _
    $region15: #{tpu_custom_call.1} parent=1 // pred_check_branch
      %49 = sbr.rel (0) target = $region17
    $region16: #{tpu_custom_call.1} parent=1 // pred_region
      %51 = dma.done [#allocation3], 1024
    $region17: #{tpu_custom_call.1} parent=1 // pred_fallthru
      _
    // Predicated region
    $region18: #{tpu_custom_call.1} parent=1 // pred_check
      _
    $region19: #{tpu_custom_call.1} parent=1 // pred_check_branch
      %53 = sbr.rel (0) target = $region21
    $region20: #{tpu_custom_call.1} parent=1 // pred_region
      %55 = dma.done [#allocation6], 4096
    $region21: #{tpu_custom_call.1} parent=1 // pred_fallthru
      _
    // Predicated region
    $region22: #{tpu_custom_call.1} parent=1 // pred_check
      _
    $region23: #{tpu_custom_call.1} parent=1 // pred_check_branch
      %57 = sbr.rel (0) target = $region25
    $region24: #{tpu_custom_call.1} parent=1 // pred_region
      %59 = dma.done [#allocation6], 64
    $region25: #{tpu_custom_call.1} parent=1 // pred_fallthru
      _
    %v60 = vld [vmem:[#allocation2] sm:$0xf]
    %v61 = vld [vmem:[#allocation2 + $0x4] sm:$0xf]
    %v62 = vld [vmem:[#allocation2 + $0x8] sm:$0xf]
    %v63 = vld [vmem:[#allocation2 + $0xc] sm:$0xf]
    %v64 = vld [vmem:[#allocation2 + $0x10] sm:$0xf]
    %v65 = vld [vmem:[#allocation2 + $0x14] sm:$0xf]
    %v66 = vld [vmem:[#allocation2 + $0x18] sm:$0xf]
    %v67 = vld [vmem:[#allocation2 + $0x1c] sm:$0xf]
    %v68 = vld [vmem:[#allocation2 + $0x20] sm:$0xf]
    %v69 = vld [vmem:[#allocation2 + $0x24] sm:$0xf]
    %v70 = vld [vmem:[#allocation2 + $0x28] sm:$0xf]
    %v71 = vld [vmem:[#allocation2 + $0x2c] sm:$0xf]
    %v72 = vld [vmem:[#allocation2 + $0x30] sm:$0xf]
    %v73 = vld [vmem:[#allocation2 + $0x34] sm:$0xf]
    %v74 = vld [vmem:[#allocation2 + $0x38] sm:$0xf]
    %v75 = vld [vmem:[#allocation2 + $0x3c] sm:$0xf]
    %v76 = vld [vmem:[#allocation5] sm:$0xff]
    %v77 = vld [vmem:[#allocation5 + $0x8] sm:$0xff]
    %v78 = vld [vmem:[#allocation5 + $0x10] sm:$0xff]
    %v79 = vld [vmem:[#allocation5 + $0x18] sm:$0xff]
    %v80 = vld [vmem:[#allocation5 + $0x20] sm:$0xff]
    %v81 = vld [vmem:[#allocation5 + $0x28] sm:$0xff]
    %v82 = vld [vmem:[#allocation5 + $0x30] sm:$0xff]
    %v83 = vld [vmem:[#allocation5 + $0x38] sm:$0xff]
    %v84 = vld [vmem:[#allocation5 + $0x40] sm:$0xff]
    %v85 = vld [vmem:[#allocation5 + $0x48] sm:$0xff]
    %v86 = vld [vmem:[#allocation5 + $0x50] sm:$0xff]
    %v87 = vld [vmem:[#allocation5 + $0x58] sm:$0xff]
    %v88 = vld [vmem:[#allocation5 + $0x60] sm:$0xff]
    %v89 = vld [vmem:[#allocation5 + $0x68] sm:$0xff]
    %v90 = vld [vmem:[#allocation5 + $0x70] sm:$0xff]
    %v91 = vld [vmem:[#allocation5 + $0x78] sm:$0xff]
    %v92 = vld [vmem:[#allocation5 + $0x80] sm:$0xff]
    %v93 = vld [vmem:[#allocation5 + $0x88] sm:$0xff]
    %v94 = vld [vmem:[#allocation5 + $0x90] sm:$0xff]
    %v95 = vld [vmem:[#allocation5 + $0x98] sm:$0xff]
    %v96 = vld [vmem:[#allocation5 + $0xa0] sm:$0xff]
    %v97 = vld [vmem:[#allocation5 + $0xa8] sm:$0xff]
    %v98 = vld [vmem:[#allocation5 + $0xb0] sm:$0xff]
    %v99 = vld [vmem:[#allocation5 + $0xb8] sm:$0xff]
    %v100 = vld [vmem:[#allocation5 + $0xc0] sm:$0xff]
    %v101 = vld [vmem:[#allocation5 + $0xc8] sm:$0xff]
    %v102 = vld [vmem:[#allocation5 + $0xd0] sm:$0xff]
    %v103 = vld [vmem:[#allocation5 + $0xd8] sm:$0xff]
    %v104 = vld [vmem:[#allocation5 + $0xe0] sm:$0xff]
    %v105 = vld [vmem:[#allocation5 + $0xe8] sm:$0xff]
    %v106 = vld [vmem:[#allocation5 + $0xf0] sm:$0xff]
    %v107 = vld [vmem:[#allocation5 + $0xf8] sm:$0xff]
    %v108 = vld [vmem:[#allocation7] sm:$0xf]
    %v110 = vperm.slane %v108, 0
    %v111 = vperm.slane %v108, 1
    %v112 = vperm.slane %v108, 2
    %v113 = vperm.slane %v108, 3
    %v134 = vunpack.c.l.b16 %v60
    %v135 = vunpack.c.l.b16 %v61
    %v136 = vunpack.c.l.b16 %v62
    %v137 = vunpack.c.l.b16 %v63
    %v138 = vunpack.c.l.b16 %v64
    %v139 = vunpack.c.l.b16 %v65
    %v140 = vunpack.c.l.b16 %v66
    %v141 = vunpack.c.l.b16 %v67
    %v142 = vunpack.c.l.b16 %v68
    %v143 = vunpack.c.l.b16 %v69
    %v144 = vunpack.c.l.b16 %v70
    %v145 = vunpack.c.l.b16 %v71
    %v146 = vunpack.c.l.b16 %v72
    %v147 = vunpack.c.l.b16 %v73
    %v148 = vunpack.c.l.b16 %v74
    %v149 = vunpack.c.l.b16 %v75
    %v150 = vpack.c.b16 %v135, %v134
    %v151 = vpack.c.b16 %v137, %v136
    %v152 = vpack.c.b16 %v139, %v138
    %v153 = vpack.c.b16 %v141, %v140
    %v154 = vpack.c.b16 %v143, %v142
    %v155 = vpack.c.b16 %v145, %v144
    %v156 = vpack.c.b16 %v147, %v146
    %v157 = vpack.c.b16 %v149, %v148
    %v198 = vunpack.c.l.b16 %v76
    %v199 = vunpack.c.h.b16 %v76
    %v200 = vunpack.c.l.b16 %v77
    %v201 = vunpack.c.h.b16 %v77
    %v202 = vunpack.c.l.b16 %v78
    %v203 = vunpack.c.h.b16 %v78
    %v204 = vunpack.c.l.b16 %v79
    %v205 = vunpack.c.h.b16 %v79
    %v206 = vunpack.c.l.b16 %v80
    %v207 = vunpack.c.h.b16 %v80
    %v208 = vunpack.c.l.b16 %v81
    %v209 = vunpack.c.h.b16 %v81
    %v210 = vunpack.c.l.b16 %v82
    %v211 = vunpack.c.h.b16 %v82
    %v212 = vunpack.c.l.b16 %v83
    %v213 = vunpack.c.h.b16 %v83
    %v214 = vunpack.c.l.b16 %v84
    %v215 = vunpack.c.h.b16 %v84
    %v216 = vunpack.c.l.b16 %v85
    %v217 = vunpack.c.h.b16 %v85
    %v218 = vunpack.c.l.b16 %v86
    %v219 = vunpack.c.h.b16 %v86
    %v220 = vunpack.c.l.b16 %v87
    %v221 = vunpack.c.h.b16 %v87
    %v222 = vunpack.c.l.b16 %v88
    %v223 = vunpack.c.h.b16 %v88
    %v224 = vunpack.c.l.b16 %v89
    %v225 = vunpack.c.h.b16 %v89
    %v226 = vunpack.c.l.b16 %v90
    %v227 = vunpack.c.h.b16 %v90
    %v228 = vunpack.c.l.b16 %v91
    %v229 = vunpack.c.h.b16 %v91
    %v230 = vunpack.c.l.b16 %v92
    %v231 = vunpack.c.h.b16 %v92
    %v232 = vunpack.c.l.b16 %v93
    %v233 = vunpack.c.h.b16 %v93
    %v234 = vunpack.c.l.b16 %v94
    %v235 = vunpack.c.h.b16 %v94
    %v236 = vunpack.c.l.b16 %v95
    %v237 = vunpack.c.h.b16 %v95
    %v238 = vunpack.c.l.b16 %v96
    %v239 = vunpack.c.h.b16 %v96
    %v240 = vunpack.c.l.b16 %v97
    %v241 = vunpack.c.h.b16 %v97
    %v242 = vunpack.c.l.b16 %v98
    %v243 = vunpack.c.h.b16 %v98
    %v244 = vunpack.c.l.b16 %v99
    %v245 = vunpack.c.h.b16 %v99
    %v246 = vunpack.c.l.b16 %v100
    %v247 = vunpack.c.h.b16 %v100
    %v248 = vunpack.c.l.b16 %v101
    %v249 = vunpack.c.h.b16 %v101
    %v250 = vunpack.c.l.b16 %v102
    %v251 = vunpack.c.h.b16 %v102
    %v252 = vunpack.c.l.b16 %v103
    %v253 = vunpack.c.h.b16 %v103
    %v254 = vunpack.c.l.b16 %v104
    %v255 = vunpack.c.h.b16 %v104
    %v256 = vunpack.c.l.b16 %v105
    %v257 = vunpack.c.h.b16 %v105
    %v258 = vunpack.c.l.b16 %v106
    %v259 = vunpack.c.h.b16 %v106
    %v260 = vunpack.c.l.b16 %v107
    %v261 = vunpack.c.h.b16 %v107
    %v262 = vpack.c.b16 %v202, %v198
    %v263 = vpack.c.b16 %v203, %v199
    %v264 = vpack.c.b16 %v204, %v200
    %v265 = vpack.c.b16 %v205, %v201
    %v266 = vpack.c.b16 %v210, %v206
    %v267 = vpack.c.b16 %v211, %v207
    %v268 = vpack.c.b16 %v212, %v208
    %v269 = vpack.c.b16 %v213, %v209
    %v270 = vpack.c.b16 %v218, %v214
    %v271 = vpack.c.b16 %v219, %v215
    %v272 = vpack.c.b16 %v220, %v216
    %v273 = vpack.c.b16 %v221, %v217
    %v274 = vpack.c.b16 %v226, %v222
    %v275 = vpack.c.b16 %v227, %v223
    %v276 = vpack.c.b16 %v228, %v224
    %v277 = vpack.c.b16 %v229, %v225
    %v278 = vpack.c.b16 %v234, %v230
    %v279 = vpack.c.b16 %v235, %v231
    %v280 = vpack.c.b16 %v236, %v232
    %v281 = vpack.c.b16 %v237, %v233
    %v282 = vpack.c.b16 %v242, %v238
    %v283 = vpack.c.b16 %v243, %v239
    %v284 = vpack.c.b16 %v244, %v240
    %v285 = vpack.c.b16 %v245, %v241
    %v286 = vpack.c.b16 %v250, %v246
    %v287 = vpack.c.b16 %v251, %v247
    %v288 = vpack.c.b16 %v252, %v248
    %v289 = vpack.c.b16 %v253, %v249
    %v290 = vpack.c.b16 %v258, %v254
    %v291 = vpack.c.b16 %v259, %v255
    %v292 = vpack.c.b16 %v260, %v256
    %v293 = vpack.c.b16 %v261, %v257
    %326 = vmatpush.bf16.msra.mxu0 %v290
    %327 = vmatpush.bf16.msra.mxu0 %v286
    %328 = vmatpush.bf16.msra.mxu0 %v282
    %329 = vmatpush.bf16.msra.mxu0 %v278
    %330 = vmatpush.bf16.msra.mxu0 %v274
    %331 = vmatpush.bf16.msra.mxu0 %v270
    %332 = vmatpush.bf16.msra.mxu0 %v266
    %333 = vmatpush.bf16.msra.mxu0 %v262
    %334 = vmatmul.bf16.gmra.mxu0 %v150
    %v335 = vpop.f32.mrf.mxu0
    %v336 = vadd.f32 %v110, %v335
    %v337 = vpop.f32.mrf.mxu0
    %v338 = vadd.f32 %v110, %v337
    %339 = vmatmul.bf16.gmra.mxu0 %v151
    %v340 = vpop.f32.mrf.mxu0
    %v341 = vadd.f32 %v110, %v340
    %v342 = vpop.f32.mrf.mxu0
    %v343 = vadd.f32 %v110, %v342
    %344 = vmatmul.bf16.gmra.mxu0 %v152
    %v345 = vpop.f32.mrf.mxu0
    %v346 = vadd.f32 %v110, %v345
    %v347 = vpop.f32.mrf.mxu0
    %v348 = vadd.f32 %v110, %v347
    %349 = vmatmul.bf16.gmra.mxu0 %v153
    %v350 = vpop.f32.mrf.mxu0
    %v351 = vadd.f32 %v110, %v350
    %v352 = vpop.f32.mrf.mxu0
    %v353 = vadd.f32 %v110, %v352
    %354 = vmatmul.bf16.gmra.mxu0 %v154
    %v355 = vpop.f32.mrf.mxu0
    %v356 = vadd.f32 %v110, %v355
    %v357 = vpop.f32.mrf.mxu0
    %v358 = vadd.f32 %v110, %v357
    %359 = vmatmul.bf16.gmra.mxu0 %v155
    %v360 = vpop.f32.mrf.mxu0
    %v361 = vadd.f32 %v110, %v360
    %v362 = vpop.f32.mrf.mxu0
    %v363 = vadd.f32 %v110, %v362
    %364 = vmatmul.bf16.gmra.mxu0 %v156
    %v365 = vpop.f32.mrf.mxu0
    %v366 = vadd.f32 %v110, %v365
    %v367 = vpop.f32.mrf.mxu0
    %v368 = vadd.f32 %v110, %v367
    %369 = vmatmul.bf16.gmra.mxu0 %v157
    %v370 = vpop.f32.mrf.mxu0
    %v371 = vadd.f32 %v110, %v370
    %v372 = vpop.f32.mrf.mxu0
    %v373 = vadd.f32 %v110, %v372
    %374 = vdwg.mxu0
    %375 = vmatpush.bf16.msra.mxu0 %v291
    %376 = vmatpush.bf16.msra.mxu0 %v287
    %377 = vmatpush.bf16.msra.mxu0 %v283
    %378 = vmatpush.bf16.msra.mxu0 %v279
    %379 = vmatpush.bf16.msra.mxu0 %v275
    %380 = vmatpush.bf16.msra.mxu0 %v271
    %381 = vmatpush.bf16.msra.mxu0 %v267
    %382 = vmatpush.bf16.msra.mxu0 %v263
    %383 = vmatmul.bf16.gmra.mxu0 %v150
    %v384 = vpop.f32.mrf.mxu0
    %v385 = vadd.f32 %v111, %v384
    %v386 = vpop.f32.mrf.mxu0
    %v387 = vadd.f32 %v111, %v386
    %388 = vmatmul.bf16.gmra.mxu0 %v151
    %v389 = vpop.f32.mrf.mxu0
    %v390 = vadd.f32 %v111, %v389
    %v391 = vpop.f32.mrf.mxu0
    %v392 = vadd.f32 %v111, %v391
    %393 = vmatmul.bf16.gmra.mxu0 %v152
    %v394 = vpop.f32.mrf.mxu0
    %v395 = vadd.f32 %v111, %v394
    %v396 = vpop.f32.mrf.mxu0
    %v397 = vadd.f32 %v111, %v396
    %398 = vmatmul.bf16.gmra.mxu0 %v153
    %v399 = vpop.f32.mrf.mxu0
    %v400 = vadd.f32 %v111, %v399
    %v401 = vpop.f32.mrf.mxu0
    %v402 = vadd.f32 %v111, %v401
    %403 = vmatmul.bf16.gmra.mxu0 %v154
    %v404 = vpop.f32.mrf.mxu0
    %v405 = vadd.f32 %v111, %v404
    %v406 = vpop.f32.mrf.mxu0
    %v407 = vadd.f32 %v111, %v406
    %408 = vmatmul.bf16.gmra.mxu0 %v155
    %v409 = vpop.f32.mrf.mxu0
    %v410 = vadd.f32 %v111, %v409
    %v411 = vpop.f32.mrf.mxu0
    %v412 = vadd.f32 %v111, %v411
    %413 = vmatmul.bf16.gmra.mxu0 %v156
    %v414 = vpop.f32.mrf.mxu0
    %v415 = vadd.f32 %v111, %v414
    %v416 = vpop.f32.mrf.mxu0
    %v417 = vadd.f32 %v111, %v416
    %418 = vmatmul.bf16.gmra.mxu0 %v157
    %v419 = vpop.f32.mrf.mxu0
    %v420 = vadd.f32 %v111, %v419
    %v421 = vpop.f32.mrf.mxu0
    %v422 = vadd.f32 %v111, %v421
    %423 = vdwg.mxu0
    %424 = vmatpush.bf16.msra.mxu0 %v292
    %425 = vmatpush.bf16.msra.mxu0 %v288
    %426 = vmatpush.bf16.msra.mxu0 %v284
    %427 = vmatpush.bf16.msra.mxu0 %v280
    %428 = vmatpush.bf16.msra.mxu0 %v276
    %429 = vmatpush.bf16.msra.mxu0 %v272
    %430 = vmatpush.bf16.msra.mxu0 %v268
    %431 = vmatpush.bf16.msra.mxu0 %v264
    %432 = vmatmul.bf16.gmra.mxu0 %v150
    %v433 = vpop.f32.mrf.mxu0
    %v434 = vadd.f32 %v112, %v433
    %v435 = vpop.f32.mrf.mxu0
    %v436 = vadd.f32 %v112, %v435
    %437 = vmatmul.bf16.gmra.mxu0 %v151
    %v438 = vpop.f32.mrf.mxu0
    %v439 = vadd.f32 %v112, %v438
    %v440 = vpop.f32.mrf.mxu0
    %v441 = vadd.f32 %v112, %v440
    %442 = vmatmul.bf16.gmra.mxu0 %v152
    %v443 = vpop.f32.mrf.mxu0
    %v444 = vadd.f32 %v112, %v443
    %v445 = vpop.f32.mrf.mxu0
    %v446 = vadd.f32 %v112, %v445
    %447 = vmatmul.bf16.gmra.mxu0 %v153
    %v448 = vpop.f32.mrf.mxu0
    %v449 = vadd.f32 %v112, %v448
    %v450 = vpop.f32.mrf.mxu0
    %v451 = vadd.f32 %v112, %v450
    %452 = vmatmul.bf16.gmra.mxu0 %v154
    %v453 = vpop.f32.mrf.mxu0
    %v454 = vadd.f32 %v112, %v453
    %v455 = vpop.f32.mrf.mxu0
    %v456 = vadd.f32 %v112, %v455
    %457 = vmatmul.bf16.gmra.mxu0 %v155
    %v458 = vpop.f32.mrf.mxu0
    %v459 = vadd.f32 %v112, %v458
    %v460 = vpop.f32.mrf.mxu0
    %v461 = vadd.f32 %v112, %v460
    %462 = vmatmul.bf16.gmra.mxu0 %v156
    %v463 = vpop.f32.mrf.mxu0
    %v464 = vadd.f32 %v112, %v463
    %v465 = vpop.f32.mrf.mxu0
    %v466 = vadd.f32 %v112, %v465
    %467 = vmatmul.bf16.gmra.mxu0 %v157
    %v468 = vpop.f32.mrf.mxu0
    %v469 = vadd.f32 %v112, %v468
    %v470 = vpop.f32.mrf.mxu0
    %v471 = vadd.f32 %v112, %v470
    %472 = vdwg.mxu0
    %473 = vmatpush.bf16.msra.mxu0 %v293
    %474 = vmatpush.bf16.msra.mxu0 %v289
    %475 = vmatpush.bf16.msra.mxu0 %v285
    %476 = vmatpush.bf16.msra.mxu0 %v281
    %477 = vmatpush.bf16.msra.mxu0 %v277
    %478 = vmatpush.bf16.msra.mxu0 %v273
    %479 = vmatpush.bf16.msra.mxu0 %v269
    %480 = vmatpush.bf16.msra.mxu0 %v265
    %481 = vmatmul.bf16.gmra.mxu0 %v150
    %v482 = vpop.f32.mrf.mxu0
    %v483 = vadd.f32 %v113, %v482
    %v484 = vpop.f32.mrf.mxu0
    %v485 = vadd.f32 %v113, %v484
    %486 = vmatmul.bf16.gmra.mxu0 %v151
    %v487 = vpop.f32.mrf.mxu0
    %v488 = vadd.f32 %v113, %v487
    %v489 = vpop.f32.mrf.mxu0
    %v490 = vadd.f32 %v113, %v489
    %491 = vmatmul.bf16.gmra.mxu0 %v152
    %v492 = vpop.f32.mrf.mxu0
    %v493 = vadd.f32 %v113, %v492
    %v494 = vpop.f32.mrf.mxu0
    %v495 = vadd.f32 %v113, %v494
    %496 = vmatmul.bf16.gmra.mxu0 %v153
    %v497 = vpop.f32.mrf.mxu0
    %v498 = vadd.f32 %v113, %v497
    %v499 = vpop.f32.mrf.mxu0
    %v500 = vadd.f32 %v113, %v499
    %501 = vmatmul.bf16.gmra.mxu0 %v154
    %v502 = vpop.f32.mrf.mxu0
    %v503 = vadd.f32 %v113, %v502
    %v504 = vpop.f32.mrf.mxu0
    %v505 = vadd.f32 %v113, %v504
    %506 = vmatmul.bf16.gmra.mxu0 %v155
    %v507 = vpop.f32.mrf.mxu0
    %v508 = vadd.f32 %v113, %v507
    %v509 = vpop.f32.mrf.mxu0
    %v510 = vadd.f32 %v113, %v509
    %511 = vmatmul.bf16.gmra.mxu0 %v156
    %v512 = vpop.f32.mrf.mxu0
    %v513 = vadd.f32 %v113, %v512
    %v514 = vpop.f32.mrf.mxu0
    %v515 = vadd.f32 %v113, %v514
    %516 = vmatmul.bf16.gmra.mxu0 %v157
    %v517 = vpop.f32.mrf.mxu0
    %v518 = vadd.f32 %v113, %v517
    %v519 = vpop.f32.mrf.mxu0
    %v520 = vadd.f32 %v113, %v519
    %521 = vdwg.mxu0
    %v522 = vpack.c.bf16 %v385, %v336
    %v523 = vpack.c.bf16 %v483, %v434
    %v524 = vpack.c.bf16 %v387, %v338
    %v525 = vpack.c.bf16 %v485, %v436
    %v526 = vpack.c.bf16 %v390, %v341
    %v527 = vpack.c.bf16 %v488, %v439
    %v528 = vpack.c.bf16 %v392, %v343
    %v529 = vpack.c.bf16 %v490, %v441
    %v530 = vpack.c.bf16 %v395, %v346
    %v531 = vpack.c.bf16 %v493, %v444
    %v532 = vpack.c.bf16 %v397, %v348
    %v533 = vpack.c.bf16 %v495, %v446
    %v534 = vpack.c.bf16 %v400, %v351
    %v535 = vpack.c.bf16 %v498, %v449
    %v536 = vpack.c.bf16 %v402, %v353
    %v537 = vpack.c.bf16 %v500, %v451
    %v538 = vpack.c.bf16 %v405, %v356
    %v539 = vpack.c.bf16 %v503, %v454
    %v540 = vpack.c.bf16 %v407, %v358
    %v541 = vpack.c.bf16 %v505, %v456
    %v542 = vpack.c.bf16 %v410, %v361
    %v543 = vpack.c.bf16 %v508, %v459
    %v544 = vpack.c.bf16 %v412, %v363
    %v545 = vpack.c.bf16 %v510, %v461
    %v546 = vpack.c.bf16 %v415, %v366
    %v547 = vpack.c.bf16 %v513, %v464
    %v548 = vpack.c.bf16 %v417, %v368
    %v549 = vpack.c.bf16 %v515, %v466
    %v550 = vpack.c.bf16 %v420, %v371
    %v551 = vpack.c.bf16 %v518, %v469
    %v552 = vpack.c.bf16 %v422, %v373
    %v553 = vpack.c.bf16 %v520, %v471
    %554 = vst [vmem:[#allocation8] sm:$0xff] %v522
    %555 = vst [vmem:[#allocation8 + $0x8] sm:$0xff] %v523
    %556 = vst [vmem:[#allocation8 + $0x10] sm:$0xff] %v524
    %557 = vst [vmem:[#allocation8 + $0x18] sm:$0xff] %v525
    %558 = vst [vmem:[#allocation8 + $0x20] sm:$0xff] %v526
    %559 = vst [vmem:[#allocation8 + $0x28] sm:$0xff] %v527
    %560 = vst [vmem:[#allocation8 + $0x30] sm:$0xff] %v528
    %561 = vst [vmem:[#allocation8 + $0x38] sm:$0xff] %v529
    %562 = vst [vmem:[#allocation8 + $0x40] sm:$0xff] %v530
    %563 = vst [vmem:[#allocation8 + $0x48] sm:$0xff] %v531
    %564 = vst [vmem:[#allocation8 + $0x50] sm:$0xff] %v532
    %565 = vst [vmem:[#allocation8 + $0x58] sm:$0xff] %v533
    %566 = vst [vmem:[#allocation8 + $0x60] sm:$0xff] %v534
    %567 = vst [vmem:[#allocation8 + $0x68] sm:$0xff] %v535
    %568 = vst [vmem:[#allocation8 + $0x70] sm:$0xff] %v536
    %569 = vst [vmem:[#allocation8 + $0x78] sm:$0xff] %v537
    %570 = vst [vmem:[#allocation8 + $0x80] sm:$0xff] %v538
    %571 = vst [vmem:[#allocation8 + $0x88] sm:$0xff] %v539
    %572 = vst [vmem:[#allocation8 + $0x90] sm:$0xff] %v540
    %573 = vst [vmem:[#allocation8 + $0x98] sm:$0xff] %v541
    %574 = vst [vmem:[#allocation8 + $0xa0] sm:$0xff] %v542
    %575 = vst [vmem:[#allocation8 + $0xa8] sm:$0xff] %v543
    %576 = vst [vmem:[#allocation8 + $0xb0] sm:$0xff] %v544
    %577 = vst [vmem:[#allocation8 + $0xb8] sm:$0xff] %v545
    %578 = vst [vmem:[#allocation8 + $0xc0] sm:$0xff] %v546
    %579 = vst [vmem:[#allocation8 + $0xc8] sm:$0xff] %v547
    %580 = vst [vmem:[#allocation8 + $0xd0] sm:$0xff] %v548
    %581 = vst [vmem:[#allocation8 + $0xd8] sm:$0xff] %v549
    %582 = vst [vmem:[#allocation8 + $0xe0] sm:$0xff] %v550
    %583 = vst [vmem:[#allocation8 + $0xe8] sm:$0xff] %v551
    %584 = vst [vmem:[#allocation8 + $0xf0] sm:$0xff] %v552
    %585 = vst [vmem:[#allocation8 + $0xf8] sm:$0xff] %v553
    // Predicated region
    $region26: #{tpu_custom_call.1} parent=1 // pred_check
      _
    $region27: #{tpu_custom_call.1} parent=1 // pred_check_branch
      %587 = sbr.rel (0) target = $region29
    $region28: #{tpu_custom_call.1} parent=1 // pred_region
      %589 = vsyncadd [#allocation4], 0
      %s590 = sshll.u32 [#allocation8], 4
      %s591 = int_to_ptr.vmem [resolvable:$true] %s590
      %s592 = sshll.u32 %s3, 4
      %s593 = int_to_ptr.hbm [resolvable:$true] %s592
      %598 = dma.vmem_to_hbm [thread:$0]  %s591, 4096, %s593, [#allocation4], 256, 256, 16
    $region29: #{tpu_custom_call.1} parent=1 // pred_fallthru
      _
    // Predicated region
    $region30: #{tpu_custom_call.1} parent=1 // pred_check
      _
    $region31: #{tpu_custom_call.1} parent=1 // pred_check_branch
      %600 = sbr.rel (0) target = $region33
    $region32: #{tpu_custom_call.1} parent=1 // pred_region
      %602 = dma.done [#allocation4], 4096
    $region33: #{tpu_custom_call.1} parent=1 // pred_fallthru
      _
    %603 = vsyncpa [#allocation3], 1
    %604 = vsyncpa [#allocation6], 1
    %605 = vsyncpa [#allocation4], 1

</llo_original>
